<compile_context>
chip_gen: v6e
topology: v6e:2x2x1
jax: 0.10.0
libtpu: 0.0.40
codegen_flags: <defaults>
</compile_context>

<pallas_src>
import numpy as np
import jax
import jax.numpy as jnp
from jax import lax
from jax.experimental import pallas as pl
from jax.experimental.pallas import tpu as pltpu


# ---------- MATLAB-style bicubic resize matrices (setup-time, numpy f64) ----------
def _cubic(x):
    ax = np.abs(x)
    ax2 = ax * ax
    ax3 = ax2 * ax
    c1 = (ax <= 1).astype(np.float64)
    c2 = ((ax > 1) & (ax <= 2)).astype(np.float64)
    return (1.5 * ax3 - 2.5 * ax2 + 1.0) * c1 + (-0.5 * ax3 + 2.5 * ax2 - 4.0 * ax + 2.0) * c2


def _resize_matrix(in_len, out_len, scale):
    """Dense (out_len, in_len) matrix equivalent to bicubic_imresize along one axis."""
    kernel_width = 4.0 if scale >= 1 else 4.0 / scale
    x = np.arange(1, out_len + 1, dtype=np.float64)
    u = x / scale + 0.5 * (1.0 - 1.0 / scale)
    left = np.floor(u - kernel_width / 2.0)
    P = int(np.ceil(kernel_width) + 2)
    indice = left[:, None] + np.arange(P, dtype=np.float64)[None, :]
    mid = u[:, None] - indice
    if scale < 1:
        weight = scale * _cubic(mid * scale)
    else:
        weight = _cubic(mid)
    weight = weight / weight.sum(axis=1, keepdims=True)
    indice = np.clip(indice, 1, in_len).astype(np.int64)
    M = np.zeros((out_len, in_len), dtype=np.float64)
    for o in range(out_len):
        for k in range(P):
            M[o, indice[o, k] - 1] += weight[o, k]  # clamped duplicates accumulate
    return M


def _round_up(x, m):
    return (x + m - 1) // m * m


def _cdiv(a, b):
    return (a + b - 1) // b


# Keep double-buffered (in + out) tiles comfortably inside every chip's usable
# scoped VMEM (v5e/v6e 128 MiB physical, v7x 64 MiB physical per TC).
_TILE_VMEM_BUDGET = 28 << 20


def make_dgm_forward(scale, color_channel, H, W, *, tile_batch=1024,
                     operand_dtype=jnp.float32):
    s = int(scale)
    Hs, Ws = H * s, W * s
    SS = s * s
    HW = H * W
    N = SS * HW

    # --- displacement conv weight, exactly as the torch 'default' init (one-hot) ---
    p = np.eye(SS, dtype=np.float32).reshape(SS, 1, s, s)
    disp_weight = np.tile(p, (color_channel, 1, 1, 1))  # (C*s*s, 1, s, s), frozen

    # --- bicubic resize matrices (f64 for exact setup) ---
    W_row = _resize_matrix(H, Hs, float(s))  # (Hs, H)
    W_col = _resize_matrix(W, Ws, float(s))  # (Ws, W)

    # --- (ki, kj) subpixel offsets read off the one-hot conv weight ---
    kikj = []
    for oc in range(SS):
        ki, kj = np.argwhere(disp_weight[oc, 0] == 1.0)[0]
        kikj.append((int(ki), int(kj)))

    # --- Fold bicubic upsample + stride-s one-hot conv into ONE dense matrix.
    #     out[oc] = W_row[ki::s,:] @ X @ (W_col[kj::s,:])^T
    #  => vec_row(out[oc]) = kron(W_row[ki::s,:], W_col[kj::s,:]) @ vec_row(X)
    blocks = [np.kron(W_row[ki::s, :], W_col[kj::s, :]) for (ki, kj) in kikj]
    M_full = np.concatenate(blocks, axis=0)                 # (SS*HW, HW)
    M_T = np.ascontiguousarray(M_full.T)                    # (HW, SS*HW)
    M_T_dev = jnp.asarray(M_T.astype(np.float32), dtype=operand_dtype)

    def kernel(x_ref, m_ref, o_ref):
        # one lane-dense MXU matmul per grid step: (TB, HW) @ (HW, Nc), f32 accum
        o_ref[...] = jnp.dot(x_ref[...], m_ref[...],
                             preferred_element_type=jnp.float32)

    def forward(x):
        # layout: x is NCHW (B, C, H, W) float32, same as the PyTorch module.
        B, C, Hi, Wi = x.shape
        assert (C, Hi, Wi) == (color_channel, H, W)
        BC = B * C

        # --- batch tiling: balanced, MXU-row aligned, minimal padding ---
        tb_cap = max(256, (((_TILE_VMEM_BUDGET // 4) - 2 * HW * N)
                           // max(1, 2 * (HW + N))) // 256 * 256)
        tb = min(max(8, _round_up(int(tile_batch), 8)), tb_cap)
        if BC <= tb:
            TB, n_i = _round_up(BC, 8), 1           # one step: just pad to sublane mult.
        else:
            n_i = _cdiv(BC, tb)
            TB = _round_up(_cdiv(BC, n_i), 256)     # balanced tiles, 256-row aligned
            n_i = _cdiv(BC, TB)
        BC_pad = n_i * TB

        # --- N split: only when the batch grid is a single step, so v7x's second
        #     TensorCore still gets a lane-dense chunk (512 = 4*128 lanes).
        NJ = 2 if (n_i == 1 and N % 256 == 0 and N >= 256) else 1
        Nc = N // NJ

        x2 = x.reshape(BC, HW).astype(operand_dtype)
        if BC_pad != BC:
            x2 = jnp.pad(x2, ((0, BC_pad - BC), (0, 0)))

        op_bytes = jnp.dtype(operand_dtype).itemsize
        # double-buffered x tile + M chunk (input side) + f32 output tile
        vmem_need = op_bytes * (2 * TB * HW + 2 * HW * Nc) + 4 * (2 * TB * Nc)
        vmem_limit = int(min(max(vmem_need + (6 << 20), 32 << 20), 48 << 20))

        cost = pl.CostEstimate(
            flops=2 * BC_pad * HW * N,
            transcendentals=0,
            bytes_accessed=op_bytes * (NJ * BC_pad * HW + HW * N) + 4 * BC_pad * N)

        out = pl.pallas_call(
            kernel,
            out_shape=jax.ShapeDtypeStruct((BC_pad, N), jnp.float32),
            grid=(NJ, n_i),                                   # j (N chunk) outer, i inner
            in_specs=[
                pl.BlockSpec((TB, HW), lambda j, i: (i, 0)),  # (TB, 256) dense
                pl.BlockSpec((HW, Nc), lambda j, i: (0, j)),  # resident across inner axis
            ],
            out_specs=pl.BlockSpec((TB, Nc), lambda j, i: (i, j)),  # lane-dense store
            compiler_params=pltpu.CompilerParams(
                dimension_semantics=("parallel", "parallel"),
                vmem_limit_bytes=vmem_limit),
            cost_estimate=cost,
        )(x2, M_T_dev)

        if BC_pad != BC:
            out = out[:BC]
        # channel order: color channel c, subpixel (ki, kj) -> c*s*s + ki*s + kj
        return out.reshape(B, C, SS, H, W).reshape(B, C * SS, H, W)

    def reference(x):
        # pure-JAX reference: same bicubic matrices + real grouped strided conv
        up = jnp.einsum('or,bcrw->bcow', jnp.asarray(W_row, dtype=jnp.float32), x)
        up = jnp.einsum('pw,bcow->bcop', jnp.asarray(W_col, dtype=jnp.float32), up)
        return lax.conv_general_dilated(
            up, jnp.asarray(disp_weight), window_strides=(s, s), padding='VALID',
            dimension_numbers=('NCHW', 'OIHW', 'NCHW'),
            feature_group_count=color_channel)

    return forward, reference


if __name__ == "__main__":
    B, C, H, W, scale = 2, 4, 16, 16, 2
    key = jax.random.PRNGKey(0)
    x = jax.random.normal(key, (B, C, H, W), dtype=jnp.float32)

    forward, reference = make_dgm_forward(scale, C, H, W)
    out = jax.block_until_ready(forward(x))
    ref = jax.block_until_ready(reference(x))

    assert out.shape == (B, C * scale * scale, H, W), out.shape
    err = float(jnp.max(jnp.abs(out - ref)))
    assert jnp.allclose(out, ref, atol=1e-4, rtol=1e-4), err
    print("KERNEL_OK")
</pallas_src>

<mosaic_0001>
module attributes {stable_mosaic.version = 11 : i64} {
  func.func @kernel(%arg0: i32, %arg1: i32, %arg2: memref<8x256xf32, #tpu.memory_space<vmem>>, %arg3: memref<256x512xf32, #tpu.memory_space<vmem>>, %arg4: memref<8x512xf32, #tpu.memory_space<vmem>>) attributes {dimension_semantics = [#tpu.dimension_semantics<parallel>, #tpu.dimension_semantics<parallel>], iteration_bounds = array<i64: 2, 1>, scalar_prefetch = 0 : i64, scratch_operands = 0 : i64, tpu.core_type = #tpu.core_type<tc>, window_params = [{transform_indices = @transform_0, window_bounds = array<i64: 8, 256>}, {transform_indices = @transform_1, window_bounds = array<i64: 256, 512>}, {transform_indices = @transform_2, window_bounds = array<i64: 8, 512>}]} {
    %c0 = arith.constant 0 : index
    %c0_0 = arith.constant 0 : index
    %0 = vector.load %arg2[%c0, %c0_0] : memref<8x256xf32, #tpu.memory_space<vmem>>, vector<8x256xf32>
    %c0_1 = arith.constant 0 : index
    %c0_2 = arith.constant 0 : index
    %1 = vector.load %arg3[%c0_1, %c0_2] : memref<256x512xf32, #tpu.memory_space<vmem>>, vector<256x512xf32>
    %cst = arith.constant dense<0.000000e+00> : vector<8x512xf32>
    %2 = tpu.matmul %0, %1, %cst {dimension_numbers = #tpu.dot_dimension_numbers<[1], [0], [0], [1], [0, 0, 1, 1], [], []>} : vector<8x256xf32>, vector<256x512xf32>, vector<8x512xf32> -> vector<8x512xf32>
    %c0_3 = arith.constant 0 : index
    %c0_4 = arith.constant 0 : index
    %3 = vector.load %arg4[%c0_3, %c0_4] : memref<8x512xf32, #tpu.memory_space<vmem>>, vector<8x512xf32>
    tpu.vector_store %arg4[%c0_3, %c0_4], %2 {strides = array<i32>} : memref<8x512xf32, #tpu.memory_space<vmem>>, vector<8x512xf32>,
    return
  }
  func.func @transform_0(%arg0: i32, %arg1: i32) -> (i32, i32) {
    %c0_i32 = arith.constant 0 : i32
    %c0_i32_0 = arith.constant 0 : i32
    return %arg1, %c0_i32 : i32, i32
  }
  func.func @transform_1(%arg0: i32, %arg1: i32) -> (i32, i32) {
    %c0_i32 = arith.constant 0 : i32
    %c0_i32_0 = arith.constant 0 : i32
    return %c0_i32, %arg0 : i32, i32
  }
  func.func @transform_2(%arg0: i32, %arg1: i32) -> (i32, i32) {
    %c0_i32 = arith.constant 0 : i32
    return %arg1, %arg0 : i32, i32
  }
}

</mosaic_0001>

<llo_original>
// kernel: tpu_custom_call.1
$region0: #{tpu_custom_call.1}
  #allocation0 [shape = 'u32[]', space=smem, size = 0x4, offset = 0x4, fixed_abs, tag = 'smem constant byte address 0x4 - core index']
  #allocation1 [shape = 'u32[144,128]{1,0:T(1,128)}', space=vmem, size = 0x12000, scoped, tag = 'internal scratch']
  %s0 = inlined_call_operand.hbm [shape: f32[8,256], index: 0, kind: input, shape index: {}]
  %s1 = inlined_call_operand.hbm [shape: f32[256,1024], index: 1, kind: input, shape index: {}]
  %s2 = inlined_call_operand.hbm [shape: f32[8,1024], index: 2, kind: output, shape index: {}]
  %s3 = sld [smem:[#allocation0]]
  $region49: #{tpu_custom_call.1} parent=0
    _
  %s5 = ssub.s32 1, %s3
  %s6 = scalar_select 0, %s5, %s3
  $region1: #{tpu_custom_call.1} parent=0
    #allocation2 [shape = 'u8[8192]{0}', space=vmem, size = 0x2000, scoped, tag = 'input window, operand 0, single buffered']
    #allocation3 [shape = 's32[2]{0}', space=sflag, size = 0x8, scoped, tag = 'scoped memory for tpu_custom_call.1']
    #allocation4 [shape = 's32[2]{0}', space=sflag, size = 0x8, scoped, tag = 'scoped memory for tpu_custom_call.1']
    #allocation5 [shape = 'u8[1048576]{0}', space=vmem, size = 0x100000, scoped, tag = 'input window, operand 1']
    #allocation6 [shape = 's32[2]{0}', space=sflag, size = 0x8, scoped, tag = 'scoped memory for tpu_custom_call.1']
    #allocation7 [shape = 'u8[32768]{0}', space=vmem, size = 0x8000, scoped, tag = 'output window, operand 0']
    %7 = vsyncpa [#allocation3], 0
    %8 = vsyncpa [#allocation6], 0
    %s9 = scalar_lea.sflag [#allocation6], 1
    %10 = vsyncpa %s9, 0
    %11 = vsyncpa [#allocation4], 0
    %s12 = scalar_lea.sflag [#allocation4], 1
    %13 = vsyncpa %s12, 0
    loop: start=0, step=1, limit=4
    $region2: #{tpu_custom_call.1} parent=1 // loop_pre_header
      _
    $region3: #{tpu_custom_call.1} parent=1 // loop_header
      %s15 = sphi 0, %s19
      %p16 = scmp.ge.s32.totalorder %s15, 4
      %s22 = sphi 0, %s34
      %s23 = sphi 0, %s30
      %s24 = sphi 0, %s22
      %s25 = sphi 0, %s23
      %s26 = sphi 0, %s24
      %s27 = sphi 0, %s25
      %s37 = sphi 0, %s39
      %s40 = sphi 0, %s37
      %s41 = sphi 0, %s40
      %s57 = sphi 0, %s41
      %s63 = sphi 0, %s65
      %s66 = sphi 0, %s63
      %s67 = sphi 0, %s66
      %s83 = sphi 0, %s67
      %s91 = sphi 0, %s93
      %s94 = sphi 0, %s91
      %s95 = sphi 0, %s94
      %s111 = sphi 0, %s95
    $region4: #{tpu_custom_call.1} parent=1 // loop_header_branch
      %18 = sbr.rel (%p16) target = $region8
    $region5: #{tpu_custom_call.1} parent=1 // loop_body
      %s20 = ssub.s32 %s15, 1
      %s21 = ssub.s32 %s15, 2
      %s28 = sadd.s32 1, %s23
      %p29 = scmp.ge.s32.totalorder %s28, 1
      %s30 = scalar_select %p29, 0, %s28
      %s31 = sadd.s32 1, %s22
      %s32 = scalar_select %p29, %s31, %s22
      %p33 = scmp.ge.s32.totalorder %s32, 2
      %s34 = scalar_select %p33, 0, %s32
      %s35 = ssub.s32 %s23, %s30
      %p36 = scmp.eq.s32.totalorder %s35, 0
      %s38 = sadd.s32 %s37, 1
      %s39 = scalar_select %p36, %s37, %s38
      %p42 = pneg %p36
      %p43 = scmp.eq.s32.totalorder %s15, 1
      %p44 = por %p42, %p43
      %p45 = scmp.ne.s32.totalorder %s37, %s40
      %p46 = scmp.eq.s32.totalorder %s15, 0
      %p47 = por %p45, %p46
      %p48 = scmp.ne.s32.totalorder %s37, %s40
      %p49 = scmp.eq.s32.totalorder %s20, 1
      %p50 = por %p48, %p49
      %p51 = scmp.ne.s32.totalorder %s40, %s41
      %p52 = scmp.eq.s32.totalorder %s20, 0
      %p53 = por %p51, %p52
      %p54 = scmp.ne.s32.totalorder %s40, %s41
      %p55 = scmp.eq.s32.totalorder %s21, 1
      %p56 = por %p54, %p55
      %p58 = scmp.ne.s32.totalorder %s41, %s57
      %p59 = scmp.eq.s32.totalorder %s21, 0
      %p60 = por %p58, %p59
      %s61 = ssub.s32 %s22, %s34
      %p62 = scmp.eq.s32.totalorder %s61, 0
      %s64 = sadd.s32 %s63, 1
      %s65 = scalar_select %p62, %s63, %s64
      %p68 = pneg %p62
      %p69 = scmp.eq.s32.totalorder %s15, 1
      %p70 = por %p68, %p69
      %p71 = scmp.ne.s32.totalorder %s63, %s66
      %p72 = scmp.eq.s32.totalorder %s15, 0
      %p73 = por %p71, %p72
      %p74 = scmp.ne.s32.totalorder %s63, %s66
      %p75 = scmp.eq.s32.totalorder %s20, 1
      %p76 = por %p74, %p75
      %p77 = scmp.ne.s32.totalorder %s66, %s67
      %p78 = scmp.eq.s32.totalorder %s20, 0
      %p79 = por %p77, %p78
      %p80 = scmp.ne.s32.totalorder %s66, %s67
      %p81 = scmp.eq.s32.totalorder %s21, 1
      %p82 = por %p80, %p81
      %p84 = scmp.ne.s32.totalorder %s67, %s83
      %p85 = scmp.eq.s32.totalorder %s21, 0
      %p86 = por %p84, %p85
      %s87 = ssub.s32 %s23, %s30
      %s88 = ssub.s32 %s22, %s34
      %s89 = sor.u32 %s87, %s88
      %p90 = scmp.eq.s32.totalorder %s89, 0
      %s92 = sadd.s32 %s91, 1
      %s93 = scalar_select %p90, %s91, %s92
      %p96 = pneg %p90
      %p97 = scmp.eq.s32.totalorder %s15, 1
      %p98 = por %p96, %p97
      %p99 = scmp.ne.s32.totalorder %s91, %s94
      %p100 = scmp.eq.s32.totalorder %s15, 0
      %p101 = por %p99, %p100
      %p102 = scmp.ne.s32.totalorder %s91, %s94
      %p103 = scmp.eq.s32.totalorder %s20, 1
      %p104 = por %p102, %p103
      %p105 = scmp.ne.s32.totalorder %s94, %s95
      %p106 = scmp.eq.s32.totalorder %s20, 0
      %p107 = por %p105, %p106
      %p108 = scmp.ne.s32.totalorder %s94, %s95
      %p109 = scmp.eq.s32.totalorder %s21, 1
      %p110 = por %p108, %p109
      %p112 = scmp.ne.s32.totalorder %s95, %s111
      %p113 = scmp.eq.s32.totalorder %s21, 0
      %p114 = por %p112, %p113
      %p115 = scmp.le.s32.totalorder 1, %s15
      %p116 = scmp.lt.s32.totalorder %s15, 3
      %p117 = pnand %p115, %p116
      %p118 = pneg %p117
      // Predicated region
      $region9: #{tpu_custom_call.1} parent=5 // pred_check
        _
      $region10: #{tpu_custom_call.1} parent=5 // pred_check_branch
        %120 = sbr.rel (%p117) target = $region12
      $region11: #{tpu_custom_call.1} parent=5 // pred_region
        %s121 = ssub.s32 %s15, 1
        // Predicated region
        $region13: #{tpu_custom_call.1} parent=11 // pred_check
          %p122 = pneg %p53
        $region14: #{tpu_custom_call.1} parent=11 // pred_check_branch
          %124 = sbr.rel (%p122) target = $region16
        $region15: #{tpu_custom_call.1} parent=11 // pred_region
          %s126 = ssub.s32 256, 256
          %127 = vsyncadd [#allocation3], %s126
          %s128 = smul.addr %s25, 2
          %s129 = smul.addr %s128, 128
          %s130 = scalar_lea.hbm %s0, %s129
          %s132 = sshll.u32 [#allocation2], 4
          %s133 = int_to_ptr.vmem [resolvable:$true] %s132
          %135 = dma.hbm_to_vmem [thread:$0]  %s130, 256, %s133, [#allocation3]
        $region16: #{tpu_custom_call.1} parent=11 // pred_fallthru
          _
      $region12: #{tpu_custom_call.1} parent=5 // pred_fallthru
        _
      %p136 = scmp.lt.s32.totalorder %s15, 2
      // Predicated region
      $region17: #{tpu_custom_call.1} parent=5 // pred_check
        %p137 = pneg %p136
      $region18: #{tpu_custom_call.1} parent=5 // pred_check_branch
        %139 = sbr.rel (%p137) target = $region20
      $region19: #{tpu_custom_call.1} parent=5 // pred_region
        // Predicated region
        $region21: #{tpu_custom_call.1} parent=19 // pred_check
          %p140 = pneg %p73
        $region22: #{tpu_custom_call.1} parent=19 // pred_check_branch
          %142 = sbr.rel (%p140) target = $region24
        $region23: #{tpu_custom_call.1} parent=19 // pred_region
          %s143 = sand.u32 %s63, 1
          %s144 = scalar_lea.sflag [#allocation6], %s143
          %s145 = sand.u32 %s63, 1
          %s146 = smul.addr %s145, 1024
          %s147 = scalar_lea.vmem [#allocation5], %s146
          %s148 = smul.u32 4, %s22
          %s150 = ssub.s32 16384, 16384
          %151 = vsyncadd %s144, %s150
          %s152 = smul.addr %s148, 128
          %s153 = scalar_lea.hbm %s1, %s152
          %s154 = sshll.u32 %s147, 4
          %s155 = int_to_ptr.vmem [resolvable:$true] %s154
          %160 = dma.hbm_to_vmem [thread:$0]  %s153, 16384, %s155, %s144, 1024, 512, 32
        $region24: #{tpu_custom_call.1} parent=19 // pred_fallthru
          _
      $region20: #{tpu_custom_call.1} parent=5 // pred_fallthru
        _
      %p161 = scmp.le.s32.totalorder 1, %s15
      %p162 = scmp.lt.s32.totalorder %s15, 3
      %p163 = pnand %p161, %p162
      %p164 = pneg %p163
      // Predicated region
      $region25: #{tpu_custom_call.1} parent=5 // pred_check
        _
      $region26: #{tpu_custom_call.1} parent=5 // pred_check_branch
        %166 = sbr.rel (%p163) target = $region28
      $region27: #{tpu_custom_call.1} parent=5 // pred_region
        %s167 = ssub.s32 %s15, 1
        // Predicated region
        $region29: #{tpu_custom_call.1} parent=27 // pred_check
          %p168 = pneg %p53
        $region30: #{tpu_custom_call.1} parent=27 // pred_check_branch
          %170 = sbr.rel (%p168) target = $region32
        $region31: #{tpu_custom_call.1} parent=27 // pred_region
          %171 = dma.done [#allocation3], 256
        $region32: #{tpu_custom_call.1} parent=27 // pred_fallthru
          _
        %s172 = sand.u32 %s66, 1
        %s173 = scalar_lea.sflag [#allocation6], %s172
        %s174 = sand.u32 %s66, 1
        %s175 = smul.addr %s174, 1024
        %s176 = scalar_lea.vmem [#allocation5], %s175
        // Predicated region
        $region33: #{tpu_custom_call.1} parent=27 // pred_check
          %p177 = pneg %p79
        $region34: #{tpu_custom_call.1} parent=27 // pred_check_branch
          %179 = sbr.rel (%p177) target = $region36
        $region35: #{tpu_custom_call.1} parent=27 // pred_region
          %180 = dma.done %s173, 16384
        $region36: #{tpu_custom_call.1} parent=27 // pred_fallthru
          _
        %p181 = pneg %p53
        %p182 = pneg %p50
        %s183 = sand.u32 %s66, 1
        %s184 = scalar_lea.sflag [#allocation6], %s183
        %s185 = sand.u32 %s66, 1
        %s186 = smul.addr %s185, 1024
        %s187 = scalar_lea.vmem [#allocation5], %s186
        %p188 = pneg %p79
        %p189 = pneg %p76
        %p190 = pneg %p107
        %p191 = pneg %p104
        %s192 = sand.u32 %s94, 1
        %s193 = scalar_lea.sflag [#allocation4], %s192
        %s194 = sand.u32 %s94, 1
        %s195 = smul.addr %s194, 32
        %s196 = scalar_lea.vmem [#allocation7], %s195
        %s197 = smul.u32 4, %s24
        %s198 = smul.u32 4, %s24
        %v199 = vld [vmem:[#allocation2] sm:$0xff]
        %v200 = vld [vmem:[#allocation2 + $0x8] sm:$0xff]
        %v201 = vld [vmem:[%s176] sm:$0xff]
        %v202 = vld [vmem:[%s176 + $0x8] sm:$0xff]
        %v203 = vld [vmem:[%s176 + $0x10] sm:$0xff]
        %v204 = vld [vmem:[%s176 + $0x18] sm:$0xff]
        %v205 = vld [vmem:[%s176 + $0x20] sm:$0xff]
        %v206 = vld [vmem:[%s176 + $0x28] sm:$0xff]
        %v207 = vld [vmem:[%s176 + $0x30] sm:$0xff]
        %v208 = vld [vmem:[%s176 + $0x38] sm:$0xff]
        %v209 = vld [vmem:[%s176 + $0x40] sm:$0xff]
        %v210 = vld [vmem:[%s176 + $0x48] sm:$0xff]
        %v211 = vld [vmem:[%s176 + $0x50] sm:$0xff]
        %v212 = vld [vmem:[%s176 + $0x58] sm:$0xff]
        %v213 = vld [vmem:[%s176 + $0x60] sm:$0xff]
        %v214 = vld [vmem:[%s176 + $0x68] sm:$0xff]
        %v215 = vld [vmem:[%s176 + $0x70] sm:$0xff]
        %v216 = vld [vmem:[%s176 + $0x78] sm:$0xff]
        %v217 = vld [vmem:[%s176 + $0x80] sm:$0xff]
        %v218 = vld [vmem:[%s176 + $0x88] sm:$0xff]
        %v219 = vld [vmem:[%s176 + $0x90] sm:$0xff]
        %v220 = vld [vmem:[%s176 + $0x98] sm:$0xff]
        %v221 = vld [vmem:[%s176 + $0xa0] sm:$0xff]
        %v222 = vld [vmem:[%s176 + $0xa8] sm:$0xff]
        %v223 = vld [vmem:[%s176 + $0xb0] sm:$0xff]
        %v224 = vld [vmem:[%s176 + $0xb8] sm:$0xff]
        %v225 = vld [vmem:[%s176 + $0xc0] sm:$0xff]
        %v226 = vld [vmem:[%s176 + $0xc8] sm:$0xff]
        %v227 = vld [vmem:[%s176 + $0xd0] sm:$0xff]
        %v228 = vld [vmem:[%s176 + $0xd8] sm:$0xff]
        %v229 = vld [vmem:[%s176 + $0xe0] sm:$0xff]
        %v230 = vld [vmem:[%s176 + $0xe8] sm:$0xff]
        %v231 = vld [vmem:[%s176 + $0xf0] sm:$0xff]
        %v232 = vld [vmem:[%s176 + $0xf8] sm:$0xff]
        %v233 = vld [vmem:[%s176 + $0x100] sm:$0xff]
        %v234 = vld [vmem:[%s176 + $0x108] sm:$0xff]
        %v235 = vld [vmem:[%s176 + $0x110] sm:$0xff]
        %v236 = vld [vmem:[%s176 + $0x118] sm:$0xff]
        %v237 = vld [vmem:[%s176 + $0x120] sm:$0xff]
        %v238 = vld [vmem:[%s176 + $0x128] sm:$0xff]
        %v239 = vld [vmem:[%s176 + $0x130] sm:$0xff]
        %v240 = vld [vmem:[%s176 + $0x138] sm:$0xff]
        %v241 = vld [vmem:[%s176 + $0x140] sm:$0xff]
        %v242 = vld [vmem:[%s176 + $0x148] sm:$0xff]
        %v243 = vld [vmem:[%s176 + $0x150] sm:$0xff]
        %v244 = vld [vmem:[%s176 + $0x158] sm:$0xff]
        %v245 = vld [vmem:[%s176 + $0x160] sm:$0xff]
        %v246 = vld [vmem:[%s176 + $0x168] sm:$0xff]
        %v247 = vld [vmem:[%s176 + $0x170] sm:$0xff]
        %v248 = vld [vmem:[%s176 + $0x178] sm:$0xff]
        %v249 = vld [vmem:[%s176 + $0x180] sm:$0xff]
        %v250 = vld [vmem:[%s176 + $0x188] sm:$0xff]
        %v251 = vld [vmem:[%s176 + $0x190] sm:$0xff]
        %v252 = vld [vmem:[%s176 + $0x198] sm:$0xff]
        %v253 = vld [vmem:[%s176 + $0x1a0] sm:$0xff]
        %v254 = vld [vmem:[%s176 + $0x1a8] sm:$0xff]
        %v255 = vld [vmem:[%s176 + $0x1b0] sm:$0xff]
        %v256 = vld [vmem:[%s176 + $0x1b8] sm:$0xff]
        %v257 = vld [vmem:[%s176 + $0x1c0] sm:$0xff]
        %v258 = vld [vmem:[%s176 + $0x1c8] sm:$0xff]
        %v259 = vld [vmem:[%s176 + $0x1d0] sm:$0xff]
        %v260 = vld [vmem:[%s176 + $0x1d8] sm:$0xff]
        %v261 = vld [vmem:[%s176 + $0x1e0] sm:$0xff]
        %v262 = vld [vmem:[%s176 + $0x1e8] sm:$0xff]
        %v263 = vld [vmem:[%s176 + $0x1f0] sm:$0xff]
        %v264 = vld [vmem:[%s176 + $0x1f8] sm:$0xff]
        %v265 = vld [vmem:[%s176 + $0x200] sm:$0xff]
        %v266 = vld [vmem:[%s176 + $0x208] sm:$0xff]
        %v267 = vld [vmem:[%s176 + $0x210] sm:$0xff]
        %v268 = vld [vmem:[%s176 + $0x218] sm:$0xff]
        %v269 = vld [vmem:[%s176 + $0x220] sm:$0xff]
        %v270 = vld [vmem:[%s176 + $0x228] sm:$0xff]
        %v271 = vld [vmem:[%s176 + $0x230] sm:$0xff]
        %v272 = vld [vmem:[%s176 + $0x238] sm:$0xff]
        %v273 = vld [vmem:[%s176 + $0x240] sm:$0xff]
        %v274 = vld [vmem:[%s176 + $0x248] sm:$0xff]
        %v275 = vld [vmem:[%s176 + $0x250] sm:$0xff]
        %v276 = vld [vmem:[%s176 + $0x258] sm:$0xff]
        %v277 = vld [vmem:[%s176 + $0x260] sm:$0xff]
        %v278 = vld [vmem:[%s176 + $0x268] sm:$0xff]
        %v279 = vld [vmem:[%s176 + $0x270] sm:$0xff]
        %v280 = vld [vmem:[%s176 + $0x278] sm:$0xff]
        %v281 = vld [vmem:[%s176 + $0x280] sm:$0xff]
        %v282 = vld [vmem:[%s176 + $0x288] sm:$0xff]
        %v283 = vld [vmem:[%s176 + $0x290] sm:$0xff]
        %v284 = vld [vmem:[%s176 + $0x298] sm:$0xff]
        %v285 = vld [vmem:[%s176 + $0x2a0] sm:$0xff]
        %v286 = vld [vmem:[%s176 + $0x2a8] sm:$0xff]
        %v287 = vld [vmem:[%s176 + $0x2b0] sm:$0xff]
        %v288 = vld [vmem:[%s176 + $0x2b8] sm:$0xff]
        %v289 = vld [vmem:[%s176 + $0x2c0] sm:$0xff]
        %v290 = vld [vmem:[%s176 + $0x2c8] sm:$0xff]
        %v291 = vld [vmem:[%s176 + $0x2d0] sm:$0xff]
        %v292 = vld [vmem:[%s176 + $0x2d8] sm:$0xff]
        %v293 = vld [vmem:[%s176 + $0x2e0] sm:$0xff]
        %v294 = vld [vmem:[%s176 + $0x2e8] sm:$0xff]
        %v295 = vld [vmem:[%s176 + $0x2f0] sm:$0xff]
        %v296 = vld [vmem:[%s176 + $0x2f8] sm:$0xff]
        %v297 = vld [vmem:[%s176 + $0x300] sm:$0xff]
        %v298 = vld [vmem:[%s176 + $0x308] sm:$0xff]
        %v299 = vld [vmem:[%s176 + $0x310] sm:$0xff]
        %v300 = vld [vmem:[%s176 + $0x318] sm:$0xff]
        %v301 = vld [vmem:[%s176 + $0x320] sm:$0xff]
        %v302 = vld [vmem:[%s176 + $0x328] sm:$0xff]
        %v303 = vld [vmem:[%s176 + $0x330] sm:$0xff]
        %v304 = vld [vmem:[%s176 + $0x338] sm:$0xff]
        %v305 = vld [vmem:[%s176 + $0x340] sm:$0xff]
        %v306 = vld [vmem:[%s176 + $0x348] sm:$0xff]
        %v307 = vld [vmem:[%s176 + $0x350] sm:$0xff]
        %v308 = vld [vmem:[%s176 + $0x358] sm:$0xff]
        %v309 = vld [vmem:[%s176 + $0x360] sm:$0xff]
        %v310 = vld [vmem:[%s176 + $0x368] sm:$0xff]
        %v311 = vld [vmem:[%s176 + $0x370] sm:$0xff]
        %v312 = vld [vmem:[%s176 + $0x378] sm:$0xff]
        %v313 = vld [vmem:[%s176 + $0x380] sm:$0xff]
        %v314 = vld [vmem:[%s176 + $0x388] sm:$0xff]
        %v315 = vld [vmem:[%s176 + $0x390] sm:$0xff]
        %v316 = vld [vmem:[%s176 + $0x398] sm:$0xff]
        %v317 = vld [vmem:[%s176 + $0x3a0] sm:$0xff]
        %v318 = vld [vmem:[%s176 + $0x3a8] sm:$0xff]
        %v319 = vld [vmem:[%s176 + $0x3b0] sm:$0xff]
        %v320 = vld [vmem:[%s176 + $0x3b8] sm:$0xff]
        %v321 = vld [vmem:[%s176 + $0x3c0] sm:$0xff]
        %v322 = vld [vmem:[%s176 + $0x3c8] sm:$0xff]
        %v323 = vld [vmem:[%s176 + $0x3d0] sm:$0xff]
        %v324 = vld [vmem:[%s176 + $0x3d8] sm:$0xff]
        %v325 = vld [vmem:[%s176 + $0x3e0] sm:$0xff]
        %v326 = vld [vmem:[%s176 + $0x3e8] sm:$0xff]
        %v327 = vld [vmem:[%s176 + $0x3f0] sm:$0xff]
        %v328 = vld [vmem:[%s176 + $0x3f8] sm:$0xff]
        %329 = vmatprep.subr.mxu0 %v262
        %330 = vmatpush1.msra.mxu0 %v261
        %331 = vmatprep.subr.mxu0 %v258
        %332 = vmatpush1.msra.mxu0 %v257
        %333 = vmatprep.subr.mxu0 %v254
        %334 = vmatpush1.msra.mxu0 %v253
        %335 = vmatprep.subr.mxu0 %v250
        %336 = vmatpush1.msra.mxu0 %v249
        %337 = vmatprep.subr.mxu0 %v246
        %338 = vmatpush1.msra.mxu0 %v245
        %339 = vmatprep.subr.mxu0 %v242
        %340 = vmatpush1.msra.mxu0 %v241
        %341 = vmatprep.subr.mxu0 %v238
        %342 = vmatpush1.msra.mxu0 %v237
        %343 = vmatprep.subr.mxu0 %v234
        %344 = vmatpush1.msra.mxu0 %v233
        %345 = vmatprep.subr.mxu0 %v230
        %346 = vmatpush1.msra.mxu0 %v229
        %347 = vmatprep.subr.mxu0 %v226
        %348 = vmatpush1.msra.mxu0 %v225
        %349 = vmatprep.subr.mxu0 %v222
        %350 = vmatpush1.msra.mxu0 %v221
        %351 = vmatprep.subr.mxu0 %v218
        %352 = vmatpush1.msra.mxu0 %v217
        %353 = vmatprep.subr.mxu0 %v214
        %354 = vmatpush1.msra.mxu0 %v213
        %355 = vmatprep.subr.mxu0 %v210
        %356 = vmatpush1.msra.mxu0 %v209
        %357 = vmatprep.subr.mxu0 %v206
        %358 = vmatpush1.msra.mxu0 %v205
        %359 = vmatprep.subr.mxu0 %v202
        %360 = vmatpush1.msra.mxu0 %v201
        %361 = vmatprep.subr.mxu0 %v326
        %362 = vmatpush2.msra.mxu0 %v325
        %363 = vmatprep.subr.mxu0 %v322
        %364 = vmatpush2.msra.mxu0 %v321
        %365 = vmatprep.subr.mxu0 %v318
        %366 = vmatpush2.msra.mxu0 %v317
        %367 = vmatprep.subr.mxu0 %v314
        %368 = vmatpush2.msra.mxu0 %v313
        %369 = vmatprep.subr.mxu0 %v310
        %370 = vmatpush2.msra.mxu0 %v309
        %371 = vmatprep.subr.mxu0 %v306
        %372 = vmatpush2.msra.mxu0 %v305
        %373 = vmatprep.subr.mxu0 %v302
        %374 = vmatpush2.msra.mxu0 %v301
        %375 = vmatprep.subr.mxu0 %v298
        %376 = vmatpush2.msra.mxu0 %v297
        %377 = vmatprep.subr.mxu0 %v294
        %378 = vmatpush2.msra.mxu0 %v293
        %379 = vmatprep.subr.mxu0 %v290
        %380 = vmatpush2.msra.mxu0 %v289
        %381 = vmatprep.subr.mxu0 %v286
        %382 = vmatpush2.msra.mxu0 %v285
        %383 = vmatprep.subr.mxu0 %v282
        %384 = vmatpush2.msra.mxu0 %v281
        %385 = vmatprep.subr.mxu0 %v278
        %386 = vmatpush2.msra.mxu0 %v277
        %387 = vmatprep.subr.mxu0 %v274
        %388 = vmatpush2.msra.mxu0 %v273
        %389 = vmatprep.subr.mxu0 %v270
        %390 = vmatpush2.msra.mxu0 %v269
        %391 = vmatprep.subr.mxu0 %v266
        %392 = vmatpush2.msra.mxu0 %v265
        %393 = vmatprep.mubr.f32.mxu0 %v200
        %394 = vmatmul.mubr.f32.gmra.mxu0 %v199
        %v395 = vpop.f32.mrf.mxu0
        %v396 = vadd.f32 0.0, %v395
        %v397 = vpop.f32.mrf.mxu0
        %v398 = vadd.f32 0.0, %v397
        %399 = vdwg.mxu0
        %400 = vmatprep.subr.mxu0 %v264
        %401 = vmatpush1.msra.mxu0 %v263
        %402 = vmatprep.subr.mxu0 %v260
        %403 = vmatpush1.msra.mxu0 %v259
        %404 = vmatprep.subr.mxu0 %v256
        %405 = vmatpush1.msra.mxu0 %v255
        %406 = vmatprep.subr.mxu0 %v252
        %407 = vmatpush1.msra.mxu0 %v251
        %408 = vmatprep.subr.mxu0 %v248
        %409 = vmatpush1.msra.mxu0 %v247
        %410 = vmatprep.subr.mxu0 %v244
        %411 = vmatpush1.msra.mxu0 %v243
        %412 = vmatprep.subr.mxu0 %v240
        %413 = vmatpush1.msra.mxu0 %v239
        %414 = vmatprep.subr.mxu0 %v236
        %415 = vmatpush1.msra.mxu0 %v235
        %416 = vmatprep.subr.mxu0 %v232
        %417 = vmatpush1.msra.mxu0 %v231
        %418 = vmatprep.subr.mxu0 %v228
        %419 = vmatpush1.msra.mxu0 %v227
        %420 = vmatprep.subr.mxu0 %v224
        %421 = vmatpush1.msra.mxu0 %v223
        %422 = vmatprep.subr.mxu0 %v220
        %423 = vmatpush1.msra.mxu0 %v219
        %424 = vmatprep.subr.mxu0 %v216
        %425 = vmatpush1.msra.mxu0 %v215
        %426 = vmatprep.subr.mxu0 %v212
        %427 = vmatpush1.msra.mxu0 %v211
        %428 = vmatprep.subr.mxu0 %v208
        %429 = vmatpush1.msra.mxu0 %v207
        %430 = vmatprep.subr.mxu0 %v204
        %431 = vmatpush1.msra.mxu0 %v203
        %432 = vmatprep.subr.mxu0 %v328
        %433 = vmatpush2.msra.mxu0 %v327
        %434 = vmatprep.subr.mxu0 %v324
        %435 = vmatpush2.msra.mxu0 %v323
        %436 = vmatprep.subr.mxu0 %v320
        %437 = vmatpush2.msra.mxu0 %v319
        %438 = vmatprep.subr.mxu0 %v316
        %439 = vmatpush2.msra.mxu0 %v315
        %440 = vmatprep.subr.mxu0 %v312
        %441 = vmatpush2.msra.mxu0 %v311
        %442 = vmatprep.subr.mxu0 %v308
        %443 = vmatpush2.msra.mxu0 %v307
        %444 = vmatprep.subr.mxu0 %v304
        %445 = vmatpush2.msra.mxu0 %v303
        %446 = vmatprep.subr.mxu0 %v300
        %447 = vmatpush2.msra.mxu0 %v299
        %448 = vmatprep.subr.mxu0 %v296
        %449 = vmatpush2.msra.mxu0 %v295
        %450 = vmatprep.subr.mxu0 %v292
        %451 = vmatpush2.msra.mxu0 %v291
        %452 = vmatprep.subr.mxu0 %v288
        %453 = vmatpush2.msra.mxu0 %v287
        %454 = vmatprep.subr.mxu0 %v284
        %455 = vmatpush2.msra.mxu0 %v283
        %456 = vmatprep.subr.mxu0 %v280
        %457 = vmatpush2.msra.mxu0 %v279
        %458 = vmatprep.subr.mxu0 %v276
        %459 = vmatpush2.msra.mxu0 %v275
        %460 = vmatprep.subr.mxu0 %v272
        %461 = vmatpush2.msra.mxu0 %v271
        %462 = vmatprep.subr.mxu0 %v268
        %463 = vmatpush2.msra.mxu0 %v267
        %464 = vmatprep.mubr.f32.mxu0 %v200
        %465 = vmatmul.mubr.f32.gmra.mxu0 %v199
        %v466 = vpop.f32.mrf.mxu0
        %v467 = vadd.f32 0.0, %v466
        %v468 = vpop.f32.mrf.mxu0
        %v469 = vadd.f32 0.0, %v468
        %470 = vdwg.mxu0
        %471 = vst [vmem:[%s196] sm:$0xff] %v396
        %472 = vst [vmem:[%s196 + $0x8] sm:$0xff] %v398
        %473 = vst [vmem:[%s196 + $0x10] sm:$0xff] %v467
        %474 = vst [vmem:[%s196 + $0x18] sm:$0xff] %v469
        %s475 = sand.u32 %s94, 1
        %s476 = scalar_lea.sflag [#allocation4], %s475
        %s477 = sand.u32 %s94, 1
        %s478 = smul.addr %s477, 32
        %s479 = scalar_lea.vmem [#allocation7], %s478
        // Predicated region
        $region37: #{tpu_custom_call.1} parent=27 // pred_check
          %p480 = pneg %p104
        $region38: #{tpu_custom_call.1} parent=27 // pred_check_branch
          %482 = sbr.rel (%p480) target = $region40
        $region39: #{tpu_custom_call.1} parent=27 // pred_region
          %s483 = smul.u32 4, %s24
          %s485 = ssub.s32 512, 512
          %486 = vsyncadd %s476, %s485
          %s487 = smul.addr %s25, 8
          %s488 = sadd.s32 %s483, %s487
          %s489 = smul.addr %s488, 128
          %s490 = scalar_lea.hbm %s2, %s489
          %s492 = sshll.u32 %s479, 4
          %s493 = int_to_ptr.vmem [resolvable:$true] %s492
          %495 = dma.vmem_to_hbm [thread:$0]  %s493, 512, %s490, %s476
        $region40: #{tpu_custom_call.1} parent=27 // pred_fallthru
          _
      $region28: #{tpu_custom_call.1} parent=5 // pred_fallthru
        _
      %p496 = scmp.le.s32.totalorder 2, %s15
      // Predicated region
      $region41: #{tpu_custom_call.1} parent=5 // pred_check
        %p497 = pneg %p496
      $region42: #{tpu_custom_call.1} parent=5 // pred_check_branch
        %499 = sbr.rel (%p497) target = $region44
      $region43: #{tpu_custom_call.1} parent=5 // pred_region
        %s500 = ssub.s32 %s15, 2
        // Predicated region
        $region45: #{tpu_custom_call.1} parent=43 // pred_check
          %p501 = pneg %p110
        $region46: #{tpu_custom_call.1} parent=43 // pred_check_branch
          %503 = sbr.rel (%p501) target = $region48
        $region47: #{tpu_custom_call.1} parent=43 // pred_region
          %s504 = sand.u32 %s95, 1
          %s505 = scalar_lea.sflag [#allocation4], %s504
          %s506 = sand.u32 %s95, 1
          %s507 = smul.addr %s506, 32
          %s508 = scalar_lea.vmem [#allocation7], %s507
          %509 = dma.done %s505, 512
        $region48: #{tpu_custom_call.1} parent=43 // pred_fallthru
          _
      $region44: #{tpu_custom_call.1} parent=5 // pred_fallthru
        _
    $region6: #{tpu_custom_call.1} parent=1 // loop_footer
      %s19 = sadd.s32 1, %s15
    $region7: #{tpu_custom_call.1} parent=1 // loop_footer_branch
      %14 = sbr.rel target = $region3
    $region8: #{tpu_custom_call.1} parent=1 // loop_exit
      _
    %510 = vsyncpa [#allocation3], 1
    %s511 = scalar_lea.sflag [#allocation3], 1
    %512 = vsyncpa %s511, 1
    %513 = vsyncpa [#allocation6], 1
    %s514 = scalar_lea.sflag [#allocation6], 1
    %515 = vsyncpa %s514, 1
    %516 = vsyncpa [#allocation4], 1
    %s517 = scalar_lea.sflag [#allocation4], 1
    %518 = vsyncpa %s517, 1

</llo_original>
